<compile_context>
chip_gen: v7x
topology: tpu7x:2x2x1
jax: 0.10.0
libtpu: 0.0.40
codegen_flags: <defaults>
</compile_context>

<pallas_src>
import enum
import functools
import math

import jax
import jax.numpy as jnp
from jax.experimental import pallas as pl
from jax.experimental.pallas import tpu as pltpu


class Perturb(enum.Enum):
    NONE = 0
    PREV = 1
    NEXT = 2


def _round_up(x, m):
    return ((x + m - 1) // m) * m


def _apply_perturb(t, h_dtype, perturb):
    """t = t.to(h.dtype); optional nextafter nudge (forward of _StitchGradient)."""
    assert isinstance(perturb, Perturb), "perturb argument must be of type Perturb enum"
    t = jnp.asarray(t, dtype=h_dtype)
    if perturb is Perturb.NEXT:
        t = jnp.nextafter(t, t + 1)
    elif perturb is Perturb.PREV:
        t = jnp.nextafter(t, t - 1)
    return t


# ----------------------------------------------------------------------------
# One-time parameter preparation (hoisted out of the per-ODE-step path).
# ----------------------------------------------------------------------------
def prepare_joint_params(W1, W2, b, *, compute_dtype=jnp.bfloat16):
    """Stack [W1; W2] with zero row-padding to lane-aligned Kp and pre-cast.

    Returns (w_stack, b_row):
      w_stack : (2*Kp, K) compute_dtype  (rows [0:K]=W1, [Kp:Kp+K]=W2, rest 0)
      b_row   : (1, K)    float32
    """
    K = W1.shape[0]
    Kp = _round_up(K, 128)
    w1p = jnp.pad(W1, ((0, Kp - K), (0, 0)))
    w2p = jnp.pad(W2, ((0, Kp - K), (0, 0)))
    w_stack = jnp.concatenate([w1p, w2p], axis=0).astype(compute_dtype)
    b_row = b.reshape(1, K).astype(jnp.float32)
    return w_stack, b_row


# ----------------------------------------------------------------------------
# Pallas kernel: one row-tile of  f = tanh([h_tilde | h] @ W + b + t)
# ----------------------------------------------------------------------------
def _joint_dyn_kernel(t_ref, ht_ref, h_ref, w_ref, b_ref, o_ref, *, compute_dtype):
    t = t_ref[0]                                           # scalar from SMEM
    # In-kernel bf16 cast + lane-tile-aligned concat -> single 2*Kp-deep dot.
    x = jnp.concatenate(
        [ht_ref[...].astype(compute_dtype), h_ref[...].astype(compute_dtype)],
        axis=-1,
    )                                                      # (tile_rows, 2*Kp)
    z = jnp.dot(x, w_ref[...], preferred_element_type=jnp.float32)   # MXU, f32 acc
    o_ref[...] = jnp.tanh(z + b_ref[...] + t).astype(o_ref.dtype)    # VPU + EUP, f32


def _pick_tile_rows(M, target=512):
    """Large tiles (amortize ~0.35us/step) while keeping >=2 grid steps (v7x)."""
    if M <= 16:
        return _round_up(max(M, 1), 8)
    return max(8, min(target, _round_up(pl.cdiv(M, 2), 8)))


def _base_func_pallas(t, h_tilde, h, params, *, compute_dtype=jnp.bfloat16,
                      tile_rows=None):
    """Fused Pallas evaluation of the synthetic joint dynamics."""
    w_stack, b_row = params
    K = b_row.shape[1]
    Kp = w_stack.shape[0] // 2
    orig_shape = h.shape
    assert orig_shape[-1] == K, "hidden dim mismatch between state and params"
    M = math.prod(orig_shape[:-1]) if len(orig_shape) > 1 else 1

    ht2 = h_tilde.reshape(M, K)
    h2 = h.reshape(M, K)

    # Lane-pad activations only when K is not already 128-aligned (keeps the
    # in-kernel concat lane-tile aligned). For K % 128 == 0 there are NO
    # wrapper-side copies of the activations at all.
    if K != Kp:
        ht2 = jnp.pad(ht2, ((0, 0), (0, Kp - K)))
        h2 = jnp.pad(h2, ((0, 0), (0, Kp - K)))

    if tile_rows is None:
        tile_rows = _pick_tile_rows(M)
    grid_m = pl.cdiv(M, tile_rows)
    Mp = grid_m * tile_rows
    if Mp != M:
        ht2 = jnp.pad(ht2, ((0, Mp - M), (0, 0)))
        h2 = jnp.pad(h2, ((0, Mp - M), (0, 0)))

    t_arr = jnp.asarray(t, dtype=jnp.float32).reshape(1)

    # TODO(synk): add a K-tiled fallback (extra "arbitrary" grid axis + f32 VMEM
    # accumulator, block-tiled w_stack) for hidden dims whose resident stacked
    # weight no longer fits v7x's 64 MiB VMEM; also consider
    # pipeline_mode=pl.Buffered(1) on the resident weight/bias specs there.
    out = pl.pallas_call(
        functools.partial(_joint_dyn_kernel, compute_dtype=compute_dtype),
        out_shape=jax.ShapeDtypeStruct((Mp, K), h.dtype),
        grid=(grid_m,),
        in_specs=[
            pl.BlockSpec(memory_space=pltpu.SMEM),               # t  (scalar)
            pl.BlockSpec((tile_rows, Kp), lambda i: (i, 0)),     # h_tilde rows (f32)
            pl.BlockSpec((tile_rows, Kp), lambda i: (i, 0)),     # h       rows (f32)
            pl.BlockSpec((2 * Kp, K), lambda i: (0, 0)),         # [W1;W2] (VMEM resident)
            pl.BlockSpec((1, K), lambda i: (0, 0)),              # b       (VMEM resident)
        ],
        out_specs=pl.BlockSpec((tile_rows, K), lambda i: (i, 0)),
        compiler_params=pltpu.CompilerParams(
            dimension_semantics=("parallel",),                   # megacore-friendly
            vmem_limit_bytes=64 * 1024 * 1024,
        ),
    )(t_arr, ht2, h2, w_stack, b_row)

    if Mp != M:
        out = out[:M]
    return out.reshape(orig_shape)


# ----------------------------------------------------------------------------
# _PerturbFunc_joint.forward equivalent
# ----------------------------------------------------------------------------
def perturb_func_joint_forward(t, h_tilde, h, params, *, perturb=Perturb.NONE,
                               compute_dtype=jnp.bfloat16, tile_rows=None):
    t = _apply_perturb(t, h.dtype, perturb)        # glue: dtype cast + nextafter
    return _base_func_pallas(t, h_tilde, h, params,
                             compute_dtype=compute_dtype, tile_rows=tile_rows)


def _reference_forward(t, h_tilde, h, params, *, perturb=Perturb.NONE,
                       compute_dtype=jnp.bfloat16):
    """Pure-JAX reference using the same operand dtypes as the kernel."""
    w_stack, b_row = params
    K = b_row.shape[1]
    Kp = w_stack.shape[0] // 2
    t = _apply_perturb(t, h.dtype, perturb)
    ht2 = h_tilde.reshape(-1, K)
    h2 = h.reshape(-1, K)
    if K != Kp:
        ht2 = jnp.pad(ht2, ((0, 0), (0, Kp - K)))
        h2 = jnp.pad(h2, ((0, 0), (0, Kp - K)))
    x = jnp.concatenate([ht2, h2], axis=-1).astype(compute_dtype)
    z = jnp.dot(x, w_stack, preferred_element_type=jnp.float32)
    f = jnp.tanh(z + b_row + jnp.asarray(t, jnp.float32))
    return f.astype(h.dtype).reshape(h.shape)


if __name__ == "__main__":
    # Joint hidden state (batch, seq, hidden): M = 512 rows -> 2 row tiles of
    # 256 (grid >= 2 for v7x), hidden = 128 -> fully lane-dense, zero wrapper
    # pad/cast/slice passes on the per-step path.
    batch, seq, hidden = 2, 256, 128

    key = jax.random.PRNGKey(0)
    k_ht, k_h, k_w1, k_w2, k_b = jax.random.split(key, 5)

    h_tilde = jax.random.normal(k_ht, (batch, seq, hidden), jnp.float32)
    h = jax.random.normal(k_h, (batch, seq, hidden), jnp.float32)

    W1 = 0.1 * jax.random.normal(k_w1, (hidden, hidden), jnp.float32)
    W2 = 0.1 * jax.random.normal(k_w2, (hidden, hidden), jnp.float32)
    b = 0.1 * jax.random.normal(k_b, (hidden,), jnp.float32)

    # One-time parameter prep (hoisted out of the ODE-solver step loop).
    params = prepare_joint_params(W1, W2, b)

    t = jnp.float32(0.25)

    for perturb in (Perturb.NONE, Perturb.NEXT, Perturb.PREV):
        out = perturb_func_joint_forward(t, h_tilde, h, params, perturb=perturb)
        out = jax.block_until_ready(out)
        ref = _reference_forward(t, h_tilde, h, params, perturb=perturb)
        assert out.shape == h.shape
        assert out.dtype == h.dtype
        assert jnp.allclose(out, ref, atol=2e-3, rtol=2e-3), f"mismatch for {perturb}"

    print("KERNEL_OK")
</pallas_src>

<mosaic_0001>
module attributes {stable_mosaic.version = 11 : i64} {
  func.func @_joint_dyn_kernel(%arg0: i32, %arg1: memref<1xf32, #tpu.memory_space<smem>>, %arg2: memref<256x128xf32, #tpu.memory_space<vmem>>, %arg3: memref<256x128xf32, #tpu.memory_space<vmem>>, %arg4: memref<256x128xbf16, #tpu.memory_space<vmem>>, %arg5: memref<1x128xf32, #tpu.memory_space<vmem>>, %arg6: memref<256x128xf32, #tpu.memory_space<vmem>>) attributes {dimension_semantics = [#tpu.dimension_semantics<parallel>], iteration_bounds = array<i64: 2>, scalar_prefetch = 0 : i64, scratch_operands = 0 : i64, tpu.core_type = #tpu.core_type<tc>, window_params = [{transform_indices = @transform_0, window_bounds = array<i64: 1>}, {transform_indices = @transform_1, window_bounds = array<i64: 256, 128>}, {transform_indices = @transform_2, window_bounds = array<i64: 256, 128>}, {pipeline_mode = #tpu.pipeline_mode<synchronous>, transform_indices = @transform_3, window_bounds = array<i64: 256, 128>}, {pipeline_mode = #tpu.pipeline_mode<synchronous>, transform_indices = @transform_4, window_bounds = array<i64: 1, 128>}, {transform_indices = @transform_5, window_bounds = array<i64: 256, 128>}]} {
    %c0 = arith.constant 0 : index
    %0 = memref.load %arg1[%c0] : memref<1xf32, #tpu.memory_space<smem>>
    %c0_0 = arith.constant 0 : index
    %c0_1 = arith.constant 0 : index
    %1 = vector.load %arg2[%c0_0, %c0_1] : memref<256x128xf32, #tpu.memory_space<vmem>>, vector<256x128xf32>
    %2 = arith.truncf %1 : vector<256x128xf32> to vector<256x128xbf16>
    %c0_2 = arith.constant 0 : index
    %c0_3 = arith.constant 0 : index
    %3 = vector.load %arg3[%c0_2, %c0_3] : memref<256x128xf32, #tpu.memory_space<vmem>>, vector<256x128xf32>
    %4 = arith.truncf %3 : vector<256x128xf32> to vector<256x128xbf16>
    %5 = tpu.concatenate %2, %4 in 1 : vector<256x128xbf16>, vector<256x128xbf16> -> vector<256x256xbf16>
    %c0_4 = arith.constant 0 : index
    %c0_5 = arith.constant 0 : index
    %6 = vector.load %arg4[%c0_4, %c0_5] : memref<256x128xbf16, #tpu.memory_space<vmem>>, vector<256x128xbf16>
    %cst = arith.constant dense<0.000000e+00> : vector<256x128xf32>
    %7 = tpu.matmul %5, %6, %cst {dimension_numbers = #tpu.dot_dimension_numbers<[1], [0], [0], [1], [0, 0, 1, 1], [], []>} : vector<256x256xbf16>, vector<256x128xbf16>, vector<256x128xf32> -> vector<256x128xf32>
    %c0_6 = arith.constant 0 : index
    %c0_7 = arith.constant 0 : index
    %8 = vector.load %arg5[%c0_6, %c0_7] : memref<1x128xf32, #tpu.memory_space<vmem>>, vector<1x128xf32>
    %9 = vector.broadcast %8 : vector<1x128xf32> to vector<256x128xf32>
    %10 = arith.addf %7, %9 : vector<256x128xf32>
    %11 = vector.broadcast %0 : f32 to vector<256x128xf32>
    %12 = arith.addf %10, %11 : vector<256x128xf32>
    %13 = math.tanh %12 : vector<256x128xf32>
    %c0_8 = arith.constant 0 : index
    %c0_9 = arith.constant 0 : index
    %14 = vector.load %arg6[%c0_8, %c0_9] : memref<256x128xf32, #tpu.memory_space<vmem>>, vector<256x128xf32>
    tpu.vector_store %arg6[%c0_8, %c0_9], %13 {strides = array<i32>} : memref<256x128xf32, #tpu.memory_space<vmem>>, vector<256x128xf32>,
    return
  }
  func.func @transform_0(%arg0: i32) -> i32 {
    %c0_i32 = arith.constant 0 : i32
    %c0_i32_0 = arith.constant 0 : i32
    return %c0_i32 : i32
  }
  func.func @transform_1(%arg0: i32) -> (i32, i32) {
    %c0_i32 = arith.constant 0 : i32
    %c0_i32_0 = arith.constant 0 : i32
    return %arg0, %c0_i32 : i32, i32
  }
  func.func @transform_2(%arg0: i32) -> (i32, i32) {
    %c0_i32 = arith.constant 0 : i32
    %c0_i32_0 = arith.constant 0 : i32
    return %arg0, %c0_i32 : i32, i32
  }
  func.func @transform_3(%arg0: i32) -> (i32, i32) {
    %c0_i32 = arith.constant 0 : i32
    %c0_i32_0 = arith.constant 0 : i32
    %c0_i32_1 = arith.constant 0 : i32
    return %c0_i32, %c0_i32_0 : i32, i32
  }
  func.func @transform_4(%arg0: i32) -> (i32, i32) {
    %c0_i32 = arith.constant 0 : i32
    %c0_i32_0 = arith.constant 0 : i32
    %c0_i32_1 = arith.constant 0 : i32
    return %c0_i32, %c0_i32_0 : i32, i32
  }
  func.func @transform_5(%arg0: i32) -> (i32, i32) {
    %c0_i32 = arith.constant 0 : i32
    %c0_i32_0 = arith.constant 0 : i32
    return %arg0, %c0_i32 : i32, i32
  }
}

</mosaic_0001>

<llo_original>
// kernel: tpu_custom_call.1
$region0: #{tpu_custom_call.1}
  #allocation0 [shape = 'u32[]', space=smem, size = 0x4, offset = 0x4, fixed_abs, tag = 'smem constant byte address 0x4 - core index']
  #allocation1 [shape = 'u32[144,128]{1,0:T(1,128)}', space=vmem, size = 0x12000, scoped, tag = 'internal scratch']
  #allocation2 [shape = 'f32[1]{0:T(128)S(6)}', space=smem, size = 0x200, scoped, tag = 'scoped memory for tpu_custom_call.1']
  %s0 = inlined_call_operand.<no memory space> [shape: f32[1], index: 0, kind: input, shape index: {}]
  %s1 = inlined_call_operand.hbm [shape: f32[512,128], index: 1, kind: input, shape index: {}]
  %s2 = inlined_call_operand.hbm [shape: f32[512,128], index: 2, kind: input, shape index: {}]
  %s3 = inlined_call_operand.hbm [shape: bf16[256,128], index: 3, kind: input, shape index: {}]
  %s4 = inlined_call_operand.hbm [shape: f32[1,128], index: 4, kind: input, shape index: {}]
  %s5 = inlined_call_operand.hbm [shape: f32[512,128], index: 5, kind: output, shape index: {}]
  %s6 = sld [smem:[#allocation0]]
  $region69: #{tpu_custom_call.1} parent=0
    _
  %s8 = ssub.s32 1, %s6
  %s9 = scalar_select 0, %s8, %s6
  %10 = sst [smem:[#allocation2]] %s0
  $region1: #{tpu_custom_call.1} parent=0
    #allocation3 [shape = 'u8[262144]{0}', space=vmem, size = 0x40000, scoped, tag = 'input window, operand 1']
    #allocation4 [shape = 's32[2]{0}', space=sflag, size = 0x8, scoped, tag = 'scoped memory for tpu_custom_call.1']
    #allocation5 [shape = 's32[2]{0}', space=sflag, size = 0x8, scoped, tag = 'scoped memory for tpu_custom_call.1']
    #allocation6 [shape = 'u8[262144]{0}', space=vmem, size = 0x40000, scoped, tag = 'input window, operand 2']
    #allocation7 [shape = 's32[2]{0}', space=sflag, size = 0x8, scoped, tag = 'scoped memory for tpu_custom_call.1']
    #allocation8 [shape = 'u8[65536]{0}', space=vmem, size = 0x10000, scoped, tag = 'input window, operand 3, single buffered']
    #allocation9 [shape = 'u8[512]{0}', space=vmem, size = 0x400, scoped, tag = 'input window, operand 4, single buffered']
    #allocation10 [shape = 's32[1]{0}', space=sflag, size = 0x4, scoped, tag = 'scoped memory for tpu_custom_call.1']
    #allocation11 [shape = 'u8[262144]{0}', space=vmem, size = 0x40000, scoped, tag = 'output window, operand 0']
    %11 = vsyncpa [#allocation4], 0
    %s12 = scalar_lea.sflag [#allocation4], 1
    %13 = vsyncpa %s12, 0
    %14 = vsyncpa [#allocation7], 0
    %s15 = scalar_lea.sflag [#allocation7], 1
    %16 = vsyncpa %s15, 0
    %17 = vsyncpa [#allocation10], 0
    %18 = vsyncpa [#allocation5], 0
    %s19 = scalar_lea.sflag [#allocation5], 1
    %20 = vsyncpa %s19, 0
    loop: start=0, step=1, limit=4
    $region2: #{tpu_custom_call.1} parent=1 // loop_pre_header
      _
    $region3: #{tpu_custom_call.1} parent=1 // loop_header
      %s22 = sphi 0, %s26
      %p23 = scmp.ge.s32.totalorder %s22, 4
      %s30 = sphi 0, %s30
      %s32 = sphi 0, %s30
      %s33 = sphi 0, %s32
      %s47 = sphi 0, %s33
      %s53 = sphi 0, %s55
      %s56 = sphi 0, %s53
      %s57 = sphi 0, %s56
      %s73 = sphi 0, %s57
      %s79 = sphi 0, %s81
      %s82 = sphi 0, %s79
      %s83 = sphi 0, %s82
      %s99 = sphi 0, %s83
      %s103 = sphi 0, %s103
      %s105 = sphi 0, %s103
      %s106 = sphi 0, %s105
      %s120 = sphi 0, %s106
      %s124 = sphi 0, %s124
      %s126 = sphi 0, %s124
      %s127 = sphi 0, %s126
      %s141 = sphi 0, %s127
      %s147 = sphi 0, %s149
      %s150 = sphi 0, %s147
      %s151 = sphi 0, %s150
      %s167 = sphi 0, %s151
    $region4: #{tpu_custom_call.1} parent=1 // loop_header_branch
      %25 = sbr.rel (%p23) target = $region8
    $region5: #{tpu_custom_call.1} parent=1 // loop_body
      %s27 = ssub.s32 %s22, 1
      %s28 = ssub.s32 %s22, 2
      %s29 = sadd.s32 %s22, 1
      %s31 = sadd.s32 %s30, 1
      %p34 = scmp.eq.s32.totalorder %s22, 1
      %p35 = scmp.ne.s32.totalorder %s30, %s32
      %p36 = scmp.eq.s32.totalorder %s22, 0
      %p37 = por %p35, %p36
      %p38 = scmp.ne.s32.totalorder %s30, %s32
      %p39 = scmp.eq.s32.totalorder %s27, 1
      %p40 = por %p38, %p39
      %p41 = scmp.ne.s32.totalorder %s32, %s33
      %p42 = scmp.eq.s32.totalorder %s27, 0
      %p43 = por %p41, %p42
      %p44 = scmp.ne.s32.totalorder %s32, %s33
      %p45 = scmp.eq.s32.totalorder %s28, 1
      %p46 = por %p44, %p45
      %p48 = scmp.ne.s32.totalorder %s33, %s47
      %p49 = scmp.eq.s32.totalorder %s28, 0
      %p50 = por %p48, %p49
      %s51 = ssub.s32 %s22, %s29
      %p52 = scmp.eq.s32.totalorder %s51, 0
      %s54 = sadd.s32 %s53, 1
      %s55 = scalar_select %p52, %s53, %s54
      %p58 = pneg %p52
      %p59 = scmp.eq.s32.totalorder %s22, 1
      %p60 = por %p58, %p59
      %p61 = scmp.ne.s32.totalorder %s53, %s56
      %p62 = scmp.eq.s32.totalorder %s22, 0
      %p63 = por %p61, %p62
      %p64 = scmp.ne.s32.totalorder %s53, %s56
      %p65 = scmp.eq.s32.totalorder %s27, 1
      %p66 = por %p64, %p65
      %p67 = scmp.ne.s32.totalorder %s56, %s57
      %p68 = scmp.eq.s32.totalorder %s27, 0
      %p69 = por %p67, %p68
      %p70 = scmp.ne.s32.totalorder %s56, %s57
      %p71 = scmp.eq.s32.totalorder %s28, 1
      %p72 = por %p70, %p71
      %p74 = scmp.ne.s32.totalorder %s57, %s73
      %p75 = scmp.eq.s32.totalorder %s28, 0
      %p76 = por %p74, %p75
      %s77 = ssub.s32 %s22, %s29
      %p78 = scmp.eq.s32.totalorder %s77, 0
      %s80 = sadd.s32 %s79, 1
      %s81 = scalar_select %p78, %s79, %s80
      %p84 = pneg %p78
      %p85 = scmp.eq.s32.totalorder %s22, 1
      %p86 = por %p84, %p85
      %p87 = scmp.ne.s32.totalorder %s79, %s82
      %p88 = scmp.eq.s32.totalorder %s22, 0
      %p89 = por %p87, %p88
      %p90 = scmp.ne.s32.totalorder %s79, %s82
      %p91 = scmp.eq.s32.totalorder %s27, 1
      %p92 = por %p90, %p91
      %p93 = scmp.ne.s32.totalorder %s82, %s83
      %p94 = scmp.eq.s32.totalorder %s27, 0
      %p95 = por %p93, %p94
      %p96 = scmp.ne.s32.totalorder %s82, %s83
      %p97 = scmp.eq.s32.totalorder %s28, 1
      %p98 = por %p96, %p97
      %p100 = scmp.ne.s32.totalorder %s83, %s99
      %p101 = scmp.eq.s32.totalorder %s28, 0
      %p102 = por %p100, %p101
      %s104 = sadd.s32 %s103, 1
      %p107 = scmp.eq.s32.totalorder %s22, 1
      %p108 = scmp.ne.s32.totalorder %s103, %s105
      %p109 = scmp.eq.s32.totalorder %s22, 0
      %p110 = por %p108, %p109
      %p111 = scmp.ne.s32.totalorder %s103, %s105
      %p112 = scmp.eq.s32.totalorder %s27, 1
      %p113 = por %p111, %p112
      %p114 = scmp.ne.s32.totalorder %s105, %s106
      %p115 = scmp.eq.s32.totalorder %s27, 0
      %p116 = por %p114, %p115
      %p117 = scmp.ne.s32.totalorder %s105, %s106
      %p118 = scmp.eq.s32.totalorder %s28, 1
      %p119 = por %p117, %p118
      %p121 = scmp.ne.s32.totalorder %s106, %s120
      %p122 = scmp.eq.s32.totalorder %s28, 0
      %p123 = por %p121, %p122
      %s125 = sadd.s32 %s124, 1
      %p128 = scmp.eq.s32.totalorder %s22, 1
      %p129 = scmp.ne.s32.totalorder %s124, %s126
      %p130 = scmp.eq.s32.totalorder %s22, 0
      %p131 = por %p129, %p130
      %p132 = scmp.ne.s32.totalorder %s124, %s126
      %p133 = scmp.eq.s32.totalorder %s27, 1
      %p134 = por %p132, %p133
      %p135 = scmp.ne.s32.totalorder %s126, %s127
      %p136 = scmp.eq.s32.totalorder %s27, 0
      %p137 = por %p135, %p136
      %p138 = scmp.ne.s32.totalorder %s126, %s127
      %p139 = scmp.eq.s32.totalorder %s28, 1
      %p140 = por %p138, %p139
      %p142 = scmp.ne.s32.totalorder %s127, %s141
      %p143 = scmp.eq.s32.totalorder %s28, 0
      %p144 = por %p142, %p143
      %s145 = ssub.s32 %s22, %s29
      %p146 = scmp.eq.s32.totalorder %s145, 0
      %s148 = sadd.s32 %s147, 1
      %s149 = scalar_select %p146, %s147, %s148
      %p152 = pneg %p146
      %p153 = scmp.eq.s32.totalorder %s22, 1
      %p154 = por %p152, %p153
      %p155 = scmp.ne.s32.totalorder %s147, %s150
      %p156 = scmp.eq.s32.totalorder %s22, 0
      %p157 = por %p155, %p156
      %p158 = scmp.ne.s32.totalorder %s147, %s150
      %p159 = scmp.eq.s32.totalorder %s27, 1
      %p160 = por %p158, %p159
      %p161 = scmp.ne.s32.totalorder %s150, %s151
      %p162 = scmp.eq.s32.totalorder %s27, 0
      %p163 = por %p161, %p162
      %p164 = scmp.ne.s32.totalorder %s150, %s151
      %p165 = scmp.eq.s32.totalorder %s28, 1
      %p166 = por %p164, %p165
      %p168 = scmp.ne.s32.totalorder %s151, %s167
      %p169 = scmp.eq.s32.totalorder %s28, 0
      %p170 = por %p168, %p169
      %p171 = scmp.le.s32.totalorder 1, %s22
      %p172 = scmp.lt.s32.totalorder %s22, 3
      %p173 = pnand %p171, %p172
      %p174 = pneg %p173
      // Predicated region
      $region9: #{tpu_custom_call.1} parent=5 // pred_check
        _
      $region10: #{tpu_custom_call.1} parent=5 // pred_check_branch
        %176 = sbr.rel (%p173) target = $region12
      $region11: #{tpu_custom_call.1} parent=5 // pred_region
        %s177 = ssub.s32 %s22, 1
        // Predicated region
        $region13: #{tpu_custom_call.1} parent=11 // pred_check
          %p178 = pneg %p43
        $region14: #{tpu_custom_call.1} parent=11 // pred_check_branch
          %180 = sbr.rel (%p178) target = $region16
        $region15: #{tpu_custom_call.1} parent=11 // pred_region
          _
        $region16: #{tpu_custom_call.1} parent=11 // pred_fallthru
          _
        // Predicated region
        $region17: #{tpu_custom_call.1} parent=11 // pred_check
          %p181 = pneg %p116
        $region18: #{tpu_custom_call.1} parent=11 // pred_check_branch
          %183 = sbr.rel (%p181) target = $region20
        $region19: #{tpu_custom_call.1} parent=11 // pred_region
          %s185 = ssub.s32 2048, 2048
          %186 = vsyncadd [#allocation7], %s185
          %s187 = sshll.u32 [#allocation8], 4
          %s188 = int_to_ptr.vmem [resolvable:$true] %s187
          %193 = dma.hbm_to_vmem [thread:$0]  %s3, 2048, %s188, [#allocation7], 64, 64, 4
        $region20: #{tpu_custom_call.1} parent=11 // pred_fallthru
          _
        // Predicated region
        $region21: #{tpu_custom_call.1} parent=11 // pred_check
          %p194 = pneg %p137
        $region22: #{tpu_custom_call.1} parent=11 // pred_check_branch
          %196 = sbr.rel (%p194) target = $region24
        $region23: #{tpu_custom_call.1} parent=11 // pred_region
          %s198 = ssub.s32 16, 16
          %199 = vsyncadd [#allocation10], %s198
          %s201 = sshll.u32 [#allocation9], 4
          %s202 = int_to_ptr.vmem [resolvable:$true] %s201
          %204 = dma.hbm_to_vmem [thread:$0]  %s4, 16, %s202, [#allocation10]
        $region24: #{tpu_custom_call.1} parent=11 // pred_fallthru
          _
      $region12: #{tpu_custom_call.1} parent=5 // pred_fallthru
        _
      %p205 = scmp.lt.s32.totalorder %s22, 2
      // Predicated region
      $region25: #{tpu_custom_call.1} parent=5 // pred_check
        %p206 = pneg %p205
      $region26: #{tpu_custom_call.1} parent=5 // pred_check_branch
        %208 = sbr.rel (%p206) target = $region28
      $region27: #{tpu_custom_call.1} parent=5 // pred_region
        // Predicated region
        $region29: #{tpu_custom_call.1} parent=27 // pred_check
          %p209 = pneg %p63
        $region30: #{tpu_custom_call.1} parent=27 // pred_check_branch
          %211 = sbr.rel (%p209) target = $region32
        $region31: #{tpu_custom_call.1} parent=27 // pred_region
          %s212 = sand.u32 %s53, 1
          %s213 = scalar_lea.sflag [#allocation4], %s212
          %s214 = sand.u32 %s53, 1
          %s215 = smul.addr %s214, 256
          %s216 = scalar_lea.vmem [#allocation3], %s215
          %s217 = smul.u32 32, %s22
          %s219 = ssub.s32 4096, 4096
          %220 = vsyncadd %s213, %s219
          %s221 = smul.addr %s217, 128
          %s222 = scalar_lea.hbm %s1, %s221
          %s223 = sshll.u32 %s216, 4
          %s224 = int_to_ptr.vmem [resolvable:$true] %s223
          %229 = dma.hbm_to_vmem [thread:$0]  %s222, 4096, %s224, %s213, 128, 128, 8
        $region32: #{tpu_custom_call.1} parent=27 // pred_fallthru
          _
        // Predicated region
        $region33: #{tpu_custom_call.1} parent=27 // pred_check
          %p230 = pneg %p89
        $region34: #{tpu_custom_call.1} parent=27 // pred_check_branch
          %232 = sbr.rel (%p230) target = $region36
        $region35: #{tpu_custom_call.1} parent=27 // pred_region
          %s233 = sand.u32 %s22, 1
          %s234 = scalar_lea.sflag [#allocation7], %s233
          %s235 = sand.u32 %s79, 1
          %s236 = smul.addr %s235, 256
          %s237 = scalar_lea.vmem [#allocation6], %s236
          %s238 = smul.u32 32, %s22
          %s240 = ssub.s32 4096, 4096
          %241 = vsyncadd %s234, %s240
          %s242 = smul.addr %s238, 128
          %s243 = scalar_lea.hbm %s2, %s242
          %s244 = sshll.u32 %s237, 4
          %s245 = int_to_ptr.vmem [resolvable:$true] %s244
          %250 = dma.hbm_to_vmem [thread:$0]  %s243, 4096, %s245, %s234, 128, 128, 8
        $region36: #{tpu_custom_call.1} parent=27 // pred_fallthru
          _
      $region28: #{tpu_custom_call.1} parent=5 // pred_fallthru
        _
      %p251 = scmp.le.s32.totalorder 1, %s22
      %p252 = scmp.lt.s32.totalorder %s22, 3
      %p253 = pnand %p251, %p252
      %p254 = pneg %p253
      // Predicated region
      $region37: #{tpu_custom_call.1} parent=5 // pred_check
        _
      $region38: #{tpu_custom_call.1} parent=5 // pred_check_branch
        %256 = sbr.rel (%p253) target = $region40
      $region39: #{tpu_custom_call.1} parent=5 // pred_region
        %s257 = ssub.s32 %s22, 1
        %s258 = sand.u32 %s56, 1
        %s259 = scalar_lea.sflag [#allocation4], %s258
        %s260 = sand.u32 %s56, 1
        %s261 = smul.addr %s260, 256
        %s262 = scalar_lea.vmem [#allocation3], %s261
        // Predicated region
        $region41: #{tpu_custom_call.1} parent=39 // pred_check
          %p263 = pneg %p69
        $region42: #{tpu_custom_call.1} parent=39 // pred_check_branch
          %265 = sbr.rel (%p263) target = $region44
        $region43: #{tpu_custom_call.1} parent=39 // pred_region
          %266 = dma.done %s259, 4096
        $region44: #{tpu_custom_call.1} parent=39 // pred_fallthru
          _
        %s267 = sand.u32 %s27, 1
        %s268 = scalar_lea.sflag [#allocation7], %s267
        %s269 = sand.u32 %s82, 1
        %s270 = smul.addr %s269, 256
        %s271 = scalar_lea.vmem [#allocation6], %s270
        // Predicated region
        $region45: #{tpu_custom_call.1} parent=39 // pred_check
          %p272 = pneg %p95
        $region46: #{tpu_custom_call.1} parent=39 // pred_check_branch
          %274 = sbr.rel (%p272) target = $region48
        $region47: #{tpu_custom_call.1} parent=39 // pred_region
          %275 = dma.done %s268, 4096
        $region48: #{tpu_custom_call.1} parent=39 // pred_fallthru
          _
        // Predicated region
        $region49: #{tpu_custom_call.1} parent=39 // pred_check
          %p276 = pneg %p116
        $region50: #{tpu_custom_call.1} parent=39 // pred_check_branch
          %278 = sbr.rel (%p276) target = $region52
        $region51: #{tpu_custom_call.1} parent=39 // pred_region
          %279 = dma.done [#allocation7], 2048
        $region52: #{tpu_custom_call.1} parent=39 // pred_fallthru
          _
        // Predicated region
        $region53: #{tpu_custom_call.1} parent=39 // pred_check
          %p280 = pneg %p137
        $region54: #{tpu_custom_call.1} parent=39 // pred_check_branch
          %282 = sbr.rel (%p280) target = $region56
        $region55: #{tpu_custom_call.1} parent=39 // pred_region
          %283 = dma.done [#allocation10], 16
        $region56: #{tpu_custom_call.1} parent=39 // pred_fallthru
          _
        %p284 = pneg %p43
        %p285 = pneg %p40
        %s286 = sand.u32 %s56, 1
        %s287 = scalar_lea.sflag [#allocation4], %s286
        %s288 = sand.u32 %s56, 1
        %s289 = smul.addr %s288, 256
        %s290 = scalar_lea.vmem [#allocation3], %s289
        %p291 = pneg %p69
        %p292 = pneg %p66
        %s293 = sand.u32 %s27, 1
        %s294 = scalar_lea.sflag [#allocation7], %s293
        %s295 = sand.u32 %s82, 1
        %s296 = smul.addr %s295, 256
        %s297 = scalar_lea.vmem [#allocation6], %s296
        %p298 = pneg %p95
        %p299 = pneg %p92
        %p300 = pneg %p116
        %p301 = pneg %p113
        %p302 = pneg %p137
        %p303 = pneg %p134
        %p304 = pneg %p163
        %p305 = pneg %p160
        %s306 = sand.u32 %s150, 1
        %s307 = scalar_lea.sflag [#allocation5], %s306
        %s308 = sand.u32 %s150, 1
        %s309 = smul.addr %s308, 256
        %s310 = scalar_lea.vmem [#allocation11], %s309
        %s311 = smul.u32 32, %s27
        %s312 = smul.u32 32, %s27
        %s313 = smul.u32 32, %s27
        %s315 = sld [smem:[#allocation2]]
        %v316 = vld [vmem:[%s262] sm:$0xff]
        %v317 = vld [vmem:[%s262 + $0x8] sm:$0xff]
        %v318 = vld [vmem:[%s262 + $0x10] sm:$0xff]
        %v319 = vld [vmem:[%s262 + $0x18] sm:$0xff]
        %v320 = vld [vmem:[%s262 + $0x20] sm:$0xff]
        %v321 = vld [vmem:[%s262 + $0x28] sm:$0xff]
        %v322 = vld [vmem:[%s262 + $0x30] sm:$0xff]
        %v323 = vld [vmem:[%s262 + $0x38] sm:$0xff]
        %v324 = vld [vmem:[%s262 + $0x40] sm:$0xff]
        %v325 = vld [vmem:[%s262 + $0x48] sm:$0xff]
        %v326 = vld [vmem:[%s262 + $0x50] sm:$0xff]
        %v327 = vld [vmem:[%s262 + $0x58] sm:$0xff]
        %v328 = vld [vmem:[%s262 + $0x60] sm:$0xff]
        %v329 = vld [vmem:[%s262 + $0x68] sm:$0xff]
        %v330 = vld [vmem:[%s262 + $0x70] sm:$0xff]
        %v331 = vld [vmem:[%s262 + $0x78] sm:$0xff]
        %v332 = vld [vmem:[%s262 + $0x80] sm:$0xff]
        %v333 = vld [vmem:[%s262 + $0x88] sm:$0xff]
        %v334 = vld [vmem:[%s262 + $0x90] sm:$0xff]
        %v335 = vld [vmem:[%s262 + $0x98] sm:$0xff]
        %v336 = vld [vmem:[%s262 + $0xa0] sm:$0xff]
        %v337 = vld [vmem:[%s262 + $0xa8] sm:$0xff]
        %v338 = vld [vmem:[%s262 + $0xb0] sm:$0xff]
        %v339 = vld [vmem:[%s262 + $0xb8] sm:$0xff]
        %v340 = vld [vmem:[%s262 + $0xc0] sm:$0xff]
        %v341 = vld [vmem:[%s262 + $0xc8] sm:$0xff]
        %v342 = vld [vmem:[%s262 + $0xd0] sm:$0xff]
        %v343 = vld [vmem:[%s262 + $0xd8] sm:$0xff]
        %v344 = vld [vmem:[%s262 + $0xe0] sm:$0xff]
        %v345 = vld [vmem:[%s262 + $0xe8] sm:$0xff]
        %v346 = vld [vmem:[%s262 + $0xf0] sm:$0xff]
        %v347 = vld [vmem:[%s262 + $0xf8] sm:$0xff]
        %v348 = vpack.c.bf16 %v317, %v316
        %v349 = vpack.c.bf16 %v319, %v318
        %v350 = vpack.c.bf16 %v321, %v320
        %v351 = vpack.c.bf16 %v323, %v322
        %v352 = vpack.c.bf16 %v325, %v324
        %v353 = vpack.c.bf16 %v327, %v326
        %v354 = vpack.c.bf16 %v329, %v328
        %v355 = vpack.c.bf16 %v331, %v330
        %v356 = vpack.c.bf16 %v333, %v332
        %v357 = vpack.c.bf16 %v335, %v334
        %v358 = vpack.c.bf16 %v337, %v336
        %v359 = vpack.c.bf16 %v339, %v338
        %v360 = vpack.c.bf16 %v341, %v340
        %v361 = vpack.c.bf16 %v343, %v342
        %v362 = vpack.c.bf16 %v345, %v344
        %v363 = vpack.c.bf16 %v347, %v346
        %v364 = vld [vmem:[%s271] sm:$0xff]
        %v365 = vld [vmem:[%s271 + $0x8] sm:$0xff]
        %v366 = vld [vmem:[%s271 + $0x10] sm:$0xff]
        %v367 = vld [vmem:[%s271 + $0x18] sm:$0xff]
        %v368 = vld [vmem:[%s271 + $0x20] sm:$0xff]
        %v369 = vld [vmem:[%s271 + $0x28] sm:$0xff]
        %v370 = vld [vmem:[%s271 + $0x30] sm:$0xff]
        %v371 = vld [vmem:[%s271 + $0x38] sm:$0xff]
        %v372 = vld [vmem:[%s271 + $0x40] sm:$0xff]
        %v373 = vld [vmem:[%s271 + $0x48] sm:$0xff]
        %v374 = vld [vmem:[%s271 + $0x50] sm:$0xff]
        %v375 = vld [vmem:[%s271 + $0x58] sm:$0xff]
        %v376 = vld [vmem:[%s271 + $0x60] sm:$0xff]
        %v377 = vld [vmem:[%s271 + $0x68] sm:$0xff]
        %v378 = vld [vmem:[%s271 + $0x70] sm:$0xff]
        %v379 = vld [vmem:[%s271 + $0x78] sm:$0xff]
        %v380 = vld [vmem:[%s271 + $0x80] sm:$0xff]
        %v381 = vld [vmem:[%s271 + $0x88] sm:$0xff]
        %v382 = vld [vmem:[%s271 + $0x90] sm:$0xff]
        %v383 = vld [vmem:[%s271 + $0x98] sm:$0xff]
        %v384 = vld [vmem:[%s271 + $0xa0] sm:$0xff]
        %v385 = vld [vmem:[%s271 + $0xa8] sm:$0xff]
        %v386 = vld [vmem:[%s271 + $0xb0] sm:$0xff]
        %v387 = vld [vmem:[%s271 + $0xb8] sm:$0xff]
        %v388 = vld [vmem:[%s271 + $0xc0] sm:$0xff]
        %v389 = vld [vmem:[%s271 + $0xc8] sm:$0xff]
        %v390 = vld [vmem:[%s271 + $0xd0] sm:$0xff]
        %v391 = vld [vmem:[%s271 + $0xd8] sm:$0xff]
        %v392 = vld [vmem:[%s271 + $0xe0] sm:$0xff]
        %v393 = vld [vmem:[%s271 + $0xe8] sm:$0xff]
        %v394 = vld [vmem:[%s271 + $0xf0] sm:$0xff]
        %v395 = vld [vmem:[%s271 + $0xf8] sm:$0xff]
        %v396 = vpack.c.bf16 %v365, %v364
        %v397 = vpack.c.bf16 %v367, %v366
        %v398 = vpack.c.bf16 %v369, %v368
        %v399 = vpack.c.bf16 %v371, %v370
        %v400 = vpack.c.bf16 %v373, %v372
        %v401 = vpack.c.bf16 %v375, %v374
        %v402 = vpack.c.bf16 %v377, %v376
        %v403 = vpack.c.bf16 %v379, %v378
        %v404 = vpack.c.bf16 %v381, %v380
        %v405 = vpack.c.bf16 %v383, %v382
        %v406 = vpack.c.bf16 %v385, %v384
        %v407 = vpack.c.bf16 %v387, %v386
        %v408 = vpack.c.bf16 %v389, %v388
        %v409 = vpack.c.bf16 %v391, %v390
        %v410 = vpack.c.bf16 %v393, %v392
        %v411 = vpack.c.bf16 %v395, %v394
        %v412 = vld [vmem:[#allocation8] sm:$0xf]
        %v413 = vld [vmem:[#allocation8 + $0x4] sm:$0xf]
        %v414 = vld [vmem:[#allocation8 + $0x8] sm:$0xf]
        %v415 = vld [vmem:[#allocation8 + $0xc] sm:$0xf]
        %v416 = vld [vmem:[#allocation8 + $0x10] sm:$0xf]
        %v417 = vld [vmem:[#allocation8 + $0x14] sm:$0xf]
        %v418 = vld [vmem:[#allocation8 + $0x18] sm:$0xf]
        %v419 = vld [vmem:[#allocation8 + $0x1c] sm:$0xf]
        %v420 = vld [vmem:[#allocation8 + $0x20] sm:$0xf]
        %v421 = vld [vmem:[#allocation8 + $0x24] sm:$0xf]
        %v422 = vld [vmem:[#allocation8 + $0x28] sm:$0xf]
        %v423 = vld [vmem:[#allocation8 + $0x2c] sm:$0xf]
        %v424 = vld [vmem:[#allocation8 + $0x30] sm:$0xf]
        %v425 = vld [vmem:[#allocation8 + $0x34] sm:$0xf]
        %v426 = vld [vmem:[#allocation8 + $0x38] sm:$0xf]
        %v427 = vld [vmem:[#allocation8 + $0x3c] sm:$0xf]
        %v428 = vld [vmem:[#allocation8 + $0x40] sm:$0xf]
        %v429 = vld [vmem:[#allocation8 + $0x44] sm:$0xf]
        %v430 = vld [vmem:[#allocation8 + $0x48] sm:$0xf]
        %v431 = vld [vmem:[#allocation8 + $0x4c] sm:$0xf]
        %v432 = vld [vmem:[#allocation8 + $0x50] sm:$0xf]
        %v433 = vld [vmem:[#allocation8 + $0x54] sm:$0xf]
        %v434 = vld [vmem:[#allocation8 + $0x58] sm:$0xf]
        %v435 = vld [vmem:[#allocation8 + $0x5c] sm:$0xf]
        %v436 = vld [vmem:[#allocation8 + $0x60] sm:$0xf]
        %v437 = vld [vmem:[#allocation8 + $0x64] sm:$0xf]
        %v438 = vld [vmem:[#allocation8 + $0x68] sm:$0xf]
        %v439 = vld [vmem:[#allocation8 + $0x6c] sm:$0xf]
        %v440 = vld [vmem:[#allocation8 + $0x70] sm:$0xf]
        %v441 = vld [vmem:[#allocation8 + $0x74] sm:$0xf]
        %v442 = vld [vmem:[#allocation8 + $0x78] sm:$0xf]
        %v443 = vld [vmem:[#allocation8 + $0x7c] sm:$0xf]
        %v444 = vld [vmem:[#allocation9] sm:$0x1]
        %v446 = vlaneseq
        %v447 = vshrl.u32 %v446, 7
        %v448 = vsub.s32 0, %v447
        %v449 = vrot.slane %v444, %v448
        %v483 = vunpack.c.l.b16 %v412
        %v484 = vunpack.c.l.b16 %v413
        %v485 = vunpack.c.l.b16 %v414
        %v486 = vunpack.c.l.b16 %v415
        %v487 = vunpack.c.l.b16 %v416
        %v488 = vunpack.c.l.b16 %v417
        %v489 = vunpack.c.l.b16 %v418
        %v490 = vunpack.c.l.b16 %v419
        %v491 = vunpack.c.l.b16 %v420
        %v492 = vunpack.c.l.b16 %v421
        %v493 = vunpack.c.l.b16 %v422
        %v494 = vunpack.c.l.b16 %v423
        %v495 = vunpack.c.l.b16 %v424
        %v496 = vunpack.c.l.b16 %v425
        %v497 = vunpack.c.l.b16 %v426
        %v498 = vunpack.c.l.b16 %v427
        %v499 = vunpack.c.l.b16 %v428
        %v500 = vunpack.c.l.b16 %v429
        %v501 = vunpack.c.l.b16 %v430
        %v502 = vunpack.c.l.b16 %v431
        %v503 = vunpack.c.l.b16 %v432
        %v504 = vunpack.c.l.b16 %v433
        %v505 = vunpack.c.l.b16 %v434
        %v506 = vunpack.c.l.b16 %v435
        %v507 = vunpack.c.l.b16 %v436
        %v508 = vunpack.c.l.b16 %v437
        %v509 = vunpack.c.l.b16 %v438
        %v510 = vunpack.c.l.b16 %v439
        %v511 = vunpack.c.l.b16 %v440
        %v512 = vunpack.c.l.b16 %v441
        %v513 = vunpack.c.l.b16 %v442
        %v514 = vunpack.c.l.b16 %v443
        %v515 = vpack.c.b16 %v484, %v483
        %v516 = vpack.c.b16 %v486, %v485
        %v517 = vpack.c.b16 %v488, %v487
        %v518 = vpack.c.b16 %v490, %v489
        %v519 = vpack.c.b16 %v492, %v491
        %v520 = vpack.c.b16 %v494, %v493
        %v521 = vpack.c.b16 %v496, %v495
        %v522 = vpack.c.b16 %v498, %v497
        %v523 = vpack.c.b16 %v500, %v499
        %v524 = vpack.c.b16 %v502, %v501
        %v525 = vpack.c.b16 %v504, %v503
        %v526 = vpack.c.b16 %v506, %v505
        %v527 = vpack.c.b16 %v508, %v507
        %v528 = vpack.c.b16 %v510, %v509
        %v529 = vpack.c.b16 %v512, %v511
        %v530 = vpack.c.b16 %v514, %v513
        %547 = vmatprep.subr.bf16.mxu0 0
        %548 = vmatpush1.bf16.msra.mxu0 %v515
        %549 = vmatprep.subr.bf16.mxu0 0
        %550 = vmatpush1.bf16.msra.mxu0 %v516
        %551 = vmatprep.subr.bf16.mxu0 0
        %552 = vmatpush1.bf16.msra.mxu0 %v517
        %553 = vmatprep.subr.bf16.mxu0 0
        %554 = vmatpush1.bf16.msra.mxu0 %v518
        %555 = vmatprep.subr.bf16.mxu0 0
        %556 = vmatpush1.bf16.msra.mxu0 %v519
        %557 = vmatprep.subr.bf16.mxu0 0
        %558 = vmatpush1.bf16.msra.mxu0 %v520
        %559 = vmatprep.subr.bf16.mxu0 0
        %560 = vmatpush1.bf16.msra.mxu0 %v521
        %561 = vmatprep.subr.bf16.mxu0 0
        %562 = vmatpush1.bf16.msra.mxu0 %v522
        %563 = vmatprep.subr.bf16.mxu0 0
        %564 = vmatpush1.bf16.msra.mxu0 %v523
        %565 = vmatprep.subr.bf16.mxu0 0
        %566 = vmatpush1.bf16.msra.mxu0 %v524
        %567 = vmatprep.subr.bf16.mxu0 0
        %568 = vmatpush1.bf16.msra.mxu0 %v525
        %569 = vmatprep.subr.bf16.mxu0 0
        %570 = vmatpush1.bf16.msra.mxu0 %v526
        %571 = vmatprep.subr.bf16.mxu0 0
        %572 = vmatpush1.bf16.msra.mxu0 %v527
        %573 = vmatprep.subr.bf16.mxu0 0
        %574 = vmatpush1.bf16.msra.mxu0 %v528
        %575 = vmatprep.subr.bf16.mxu0 0
        %576 = vmatpush1.bf16.msra.mxu0 %v529
        %577 = vmatprep.subr.bf16.mxu0 0
        %578 = vmatpush1.bf16.msra.mxu0 %v530
        %579 = vmatprep.mubr.bf16.mxu0 %v396
        %580 = vmatmul.mubr.bf16.gmra.mrb[0].mxu0 %v348
        %v581 = vpop.f32.mrb[0].mxu0
        %v582 = vadd.f32 %v449, %v581
        %v583 = vpop.f32.mrb[0].mxu0
        %v584 = vpop.f32.mrb[0].mxu0
        %v585 = vadd.f32 %v449, %v584
        %v586 = vpop.f32.mrb[0].mxu0
        %587 = vmatprep.mubr.bf16.mxu0 %v397
        %588 = vmatmul.mubr.bf16.gmra.mrb[0].mxu0 %v349
        %v589 = vpop.f32.mrb[0].mxu0
        %v590 = vadd.f32 %v449, %v589
        %v591 = vpop.f32.mrb[0].mxu0
        %v592 = vpop.f32.mrb[0].mxu0
        %v593 = vadd.f32 %v449, %v592
        %v594 = vpop.f32.mrb[0].mxu0
        %595 = vmatprep.mubr.bf16.mxu0 %v398
        %596 = vmatmul.mubr.bf16.gmra.mrb[0].mxu0 %v350
        %v597 = vpop.f32.mrb[0].mxu0
        %v598 = vadd.f32 %v449, %v597
        %v599 = vpop.f32.mrb[0].mxu0
        %v600 = vpop.f32.mrb[0].mxu0
        %v601 = vadd.f32 %v449, %v600
        %v602 = vpop.f32.mrb[0].mxu0
        %603 = vmatprep.mubr.bf16.mxu0 %v399
        %604 = vmatmul.mubr.bf16.gmra.mrb[0].mxu0 %v351
        %v605 = vpop.f32.mrb[0].mxu0
        %v606 = vadd.f32 %v449, %v605
        %v607 = vpop.f32.mrb[0].mxu0
        %v608 = vpop.f32.mrb[0].mxu0
        %v609 = vadd.f32 %v449, %v608
        %v610 = vpop.f32.mrb[0].mxu0
        %611 = vmatprep.mubr.bf16.mxu0 %v400
        %612 = vmatmul.mubr.bf16.gmra.mrb[0].mxu0 %v352
        %v613 = vpop.f32.mrb[0].mxu0
        %v614 = vadd.f32 %v449, %v613
        %v615 = vpop.f32.mrb[0].mxu0
        %v616 = vpop.f32.mrb[0].mxu0
        %v617 = vadd.f32 %v449, %v616
        %v618 = vpop.f32.mrb[0].mxu0
        %619 = vmatprep.mubr.bf16.mxu0 %v401
        %620 = vmatmul.mubr.bf16.gmra.mrb[0].mxu0 %v353
        %v621 = vpop.f32.mrb[0].mxu0
        %v622 = vadd.f32 %v449, %v621
        %v623 = vpop.f32.mrb[0].mxu0
        %v624 = vpop.f32.mrb[0].mxu0
        %v625 = vadd.f32 %v449, %v624
        %v626 = vpop.f32.mrb[0].mxu0
        %627 = vmatprep.mubr.bf16.mxu0 %v402
        %628 = vmatmul.mubr.bf16.gmra.mrb[0].mxu0 %v354
        %v629 = vpop.f32.mrb[0].mxu0
        %v630 = vadd.f32 %v449, %v629
        %v631 = vpop.f32.mrb[0].mxu0
        %v632 = vpop.f32.mrb[0].mxu0
        %v633 = vadd.f32 %v449, %v632
        %v634 = vpop.f32.mrb[0].mxu0
        %635 = vmatprep.mubr.bf16.mxu0 %v403
        %636 = vmatmul.mubr.bf16.gmra.mrb[0].mxu0 %v355
        %v637 = vpop.f32.mrb[0].mxu0
        %v638 = vadd.f32 %v449, %v637
        %v639 = vpop.f32.mrb[0].mxu0
        %v640 = vpop.f32.mrb[0].mxu0
        %v641 = vadd.f32 %v449, %v640
        %v642 = vpop.f32.mrb[0].mxu0
        %643 = vmatprep.mubr.bf16.mxu0 %v404
        %644 = vmatmul.mubr.bf16.gmra.mrb[0].mxu0 %v356
        %v645 = vpop.f32.mrb[0].mxu0
        %v646 = vadd.f32 %v449, %v645
        %v647 = vpop.f32.mrb[0].mxu0
        %v648 = vpop.f32.mrb[0].mxu0
        %v649 = vadd.f32 %v449, %v648
        %v650 = vpop.f32.mrb[0].mxu0
        %651 = vmatprep.mubr.bf16.mxu0 %v405
        %652 = vmatmul.mubr.bf16.gmra.mrb[0].mxu0 %v357
        %v653 = vpop.f32.mrb[0].mxu0
        %v654 = vadd.f32 %v449, %v653
        %v655 = vpop.f32.mrb[0].mxu0
        %v656 = vpop.f32.mrb[0].mxu0
        %v657 = vadd.f32 %v449, %v656
        %v658 = vpop.f32.mrb[0].mxu0
        %659 = vmatprep.mubr.bf16.mxu0 %v406
        %660 = vmatmul.mubr.bf16.gmra.mrb[0].mxu0 %v358
        %v661 = vpop.f32.mrb[0].mxu0
        %v662 = vadd.f32 %v449, %v661
        %v663 = vpop.f32.mrb[0].mxu0
        %v664 = vpop.f32.mrb[0].mxu0
        %v665 = vadd.f32 %v449, %v664
        %v666 = vpop.f32.mrb[0].mxu0
        %667 = vmatprep.mubr.bf16.mxu0 %v407
        %668 = vmatmul.mubr.bf16.gmra.mrb[0].mxu0 %v359
        %v669 = vpop.f32.mrb[0].mxu0
        %v670 = vadd.f32 %v449, %v669
        %v671 = vpop.f32.mrb[0].mxu0
        %v672 = vpop.f32.mrb[0].mxu0
        %v673 = vadd.f32 %v449, %v672
        %v674 = vpop.f32.mrb[0].mxu0
        %675 = vmatprep.mubr.bf16.mxu0 %v408
        %676 = vmatmul.mubr.bf16.gmra.mrb[0].mxu0 %v360
        %v677 = vpop.f32.mrb[0].mxu0
        %v678 = vadd.f32 %v449, %v677
        %v679 = vpop.f32.mrb[0].mxu0
        %v680 = vpop.f32.mrb[0].mxu0
        %v681 = vadd.f32 %v449, %v680
        %v682 = vpop.f32.mrb[0].mxu0
        %683 = vmatprep.mubr.bf16.mxu0 %v409
        %684 = vmatmul.mubr.bf16.gmra.mrb[0].mxu0 %v361
        %v685 = vpop.f32.mrb[0].mxu0
        %v686 = vadd.f32 %v449, %v685
        %v687 = vpop.f32.mrb[0].mxu0
        %v688 = vpop.f32.mrb[0].mxu0
        %v689 = vadd.f32 %v449, %v688
        %v690 = vpop.f32.mrb[0].mxu0
        %691 = vmatprep.mubr.bf16.mxu0 %v410
        %692 = vmatmul.mubr.bf16.gmra.mrb[0].mxu0 %v362
        %v693 = vpop.f32.mrb[0].mxu0
        %v694 = vadd.f32 %v449, %v693
        %v695 = vpop.f32.mrb[0].mxu0
        %v696 = vpop.f32.mrb[0].mxu0
        %v697 = vadd.f32 %v449, %v696
        %v698 = vpop.f32.mrb[0].mxu0
        %699 = vmatprep.mubr.bf16.mxu0 %v411
        %700 = vmatmul.mubr.bf16.gmra.mrb[0].mxu0 %v363
        %v701 = vpop.f32.mrb[0].mxu0
        %v702 = vadd.f32 %v449, %v701
        %v703 = vpop.f32.mrb[0].mxu0
        %v704 = vpop.f32.mrb[0].mxu0
        %v705 = vadd.f32 %v449, %v704
        %v706 = vpop.f32.mrb[0].mxu0
        %707 = vdwg.mxu0
        %v708 = vstv %s315
        %v709 = vadd.f32 %v582, %v708
        %v710 = vadd.f32 %v585, %v708
        %v711 = vadd.f32 %v590, %v708
        %v712 = vadd.f32 %v593, %v708
        %v713 = vadd.f32 %v598, %v708
        %v714 = vadd.f32 %v601, %v708
        %v715 = vadd.f32 %v606, %v708
        %v716 = vadd.f32 %v609, %v708
        %v717 = vadd.f32 %v614, %v708
        %v718 = vadd.f32 %v617, %v708
        %v719 = vadd.f32 %v622, %v708
        %v720 = vadd.f32 %v625, %v708
        %v721 = vadd.f32 %v630, %v708
        %v722 = vadd.f32 %v633, %v708
        %v723 = vadd.f32 %v638, %v708
        %v724 = vadd.f32 %v641, %v708
        %v725 = vadd.f32 %v646, %v708
        %v726 = vadd.f32 %v649, %v708
        %v727 = vadd.f32 %v654, %v708
        %v728 = vadd.f32 %v657, %v708
        %v729 = vadd.f32 %v662, %v708
        %v730 = vadd.f32 %v665, %v708
        %v731 = vadd.f32 %v670, %v708
        %v732 = vadd.f32 %v673, %v708
        %v733 = vadd.f32 %v678, %v708
        %v734 = vadd.f32 %v681, %v708
        %v735 = vadd.f32 %v686, %v708
        %v736 = vadd.f32 %v689, %v708
        %v737 = vadd.f32 %v694, %v708
        %v738 = vadd.f32 %v697, %v708
        %v739 = vadd.f32 %v702, %v708
        %v740 = vadd.f32 %v705, %v708
        %v741 = vtanh.pop %v709
        %v742 = vtanh.pop %v710
        %v743 = vtanh.pop %v711
        %v744 = vtanh.pop %v712
        %v745 = vtanh.pop %v713
        %v746 = vtanh.pop %v714
        %v747 = vtanh.pop %v715
        %v748 = vtanh.pop %v716
        %v749 = vtanh.pop %v717
        %v750 = vtanh.pop %v718
        %v751 = vtanh.pop %v719
        %v752 = vtanh.pop %v720
        %v753 = vtanh.pop %v721
        %v754 = vtanh.pop %v722
        %v755 = vtanh.pop %v723
        %v756 = vtanh.pop %v724
        %v757 = vtanh.pop %v725
        %v758 = vtanh.pop %v726
        %v759 = vtanh.pop %v727
        %v760 = vtanh.pop %v728
        %v761 = vtanh.pop %v729
        %v762 = vtanh.pop %v730
        %v763 = vtanh.pop %v731
        %v764 = vtanh.pop %v732
        %v765 = vtanh.pop %v733
        %v766 = vtanh.pop %v734
        %v767 = vtanh.pop %v735
        %v768 = vtanh.pop %v736
        %v769 = vtanh.pop %v737
        %v770 = vtanh.pop %v738
        %v771 = vtanh.pop %v739
        %v772 = vtanh.pop %v740
        %773 = vst [vmem:[%s310] sm:$0xff] %v741
        %774 = vst [vmem:[%s310 + $0x8] sm:$0xff] %v742
        %775 = vst [vmem:[%s310 + $0x10] sm:$0xff] %v743
        %776 = vst [vmem:[%s310 + $0x18] sm:$0xff] %v744
        %777 = vst [vmem:[%s310 + $0x20] sm:$0xff] %v745
        %778 = vst [vmem:[%s310 + $0x28] sm:$0xff] %v746
        %779 = vst [vmem:[%s310 + $0x30] sm:$0xff] %v747
        %780 = vst [vmem:[%s310 + $0x38] sm:$0xff] %v748
        %781 = vst [vmem:[%s310 + $0x40] sm:$0xff] %v749
        %782 = vst [vmem:[%s310 + $0x48] sm:$0xff] %v750
        %783 = vst [vmem:[%s310 + $0x50] sm:$0xff] %v751
        %784 = vst [vmem:[%s310 + $0x58] sm:$0xff] %v752
        %785 = vst [vmem:[%s310 + $0x60] sm:$0xff] %v753
        %786 = vst [vmem:[%s310 + $0x68] sm:$0xff] %v754
        %787 = vst [vmem:[%s310 + $0x70] sm:$0xff] %v755
        %788 = vst [vmem:[%s310 + $0x78] sm:$0xff] %v756
        %789 = vst [vmem:[%s310 + $0x80] sm:$0xff] %v757
        %790 = vst [vmem:[%s310 + $0x88] sm:$0xff] %v758
        %791 = vst [vmem:[%s310 + $0x90] sm:$0xff] %v759
        %792 = vst [vmem:[%s310 + $0x98] sm:$0xff] %v760
        %793 = vst [vmem:[%s310 + $0xa0] sm:$0xff] %v761
        %794 = vst [vmem:[%s310 + $0xa8] sm:$0xff] %v762
        %795 = vst [vmem:[%s310 + $0xb0] sm:$0xff] %v763
        %796 = vst [vmem:[%s310 + $0xb8] sm:$0xff] %v764
        %797 = vst [vmem:[%s310 + $0xc0] sm:$0xff] %v765
        %798 = vst [vmem:[%s310 + $0xc8] sm:$0xff] %v766
        %799 = vst [vmem:[%s310 + $0xd0] sm:$0xff] %v767
        %800 = vst [vmem:[%s310 + $0xd8] sm:$0xff] %v768
        %801 = vst [vmem:[%s310 + $0xe0] sm:$0xff] %v769
        %802 = vst [vmem:[%s310 + $0xe8] sm:$0xff] %v770
        %803 = vst [vmem:[%s310 + $0xf0] sm:$0xff] %v771
        %804 = vst [vmem:[%s310 + $0xf8] sm:$0xff] %v772
        %s805 = sand.u32 %s150, 1
        %s806 = scalar_lea.sflag [#allocation5], %s805
        %s807 = sand.u32 %s150, 1
        %s808 = smul.addr %s807, 256
        %s809 = scalar_lea.vmem [#allocation11], %s808
        // Predicated region
        $region57: #{tpu_custom_call.1} parent=39 // pred_check
          %p810 = pneg %p160
        $region58: #{tpu_custom_call.1} parent=39 // pred_check_branch
          %812 = sbr.rel (%p810) target = $region60
        $region59: #{tpu_custom_call.1} parent=39 // pred_region
          %s813 = smul.u32 32, %s27
          %s815 = ssub.s32 4096, 4096
          %816 = vsyncadd %s806, %s815
          %s817 = smul.addr %s813, 128
          %s818 = scalar_lea.hbm %s5, %s817
          %s819 = sshll.u32 %s809, 4
          %s820 = int_to_ptr.vmem [resolvable:$true] %s819
          %825 = dma.vmem_to_hbm [thread:$0]  %s820, 4096, %s818, %s806, 128, 128, 8
        $region60: #{tpu_custom_call.1} parent=39 // pred_fallthru
          _
      $region40: #{tpu_custom_call.1} parent=5 // pred_fallthru
        _
      %p826 = scmp.le.s32.totalorder 2, %s22
      // Predicated region
      $region61: #{tpu_custom_call.1} parent=5 // pred_check
        %p827 = pneg %p826
      $region62: #{tpu_custom_call.1} parent=5 // pred_check_branch
        %829 = sbr.rel (%p827) target = $region64
      $region63: #{tpu_custom_call.1} parent=5 // pred_region
        %s830 = ssub.s32 %s22, 2
        // Predicated region
        $region65: #{tpu_custom_call.1} parent=63 // pred_check
          %p831 = pneg %p166
        $region66: #{tpu_custom_call.1} parent=63 // pred_check_branch
          %833 = sbr.rel (%p831) target = $region68
        $region67: #{tpu_custom_call.1} parent=63 // pred_region
          %s834 = sand.u32 %s151, 1
          %s835 = scalar_lea.sflag [#allocation5], %s834
          %s836 = sand.u32 %s151, 1
          %s837 = smul.addr %s836, 256
          %s838 = scalar_lea.vmem [#allocation11], %s837
          %839 = dma.done %s835, 4096
        $region68: #{tpu_custom_call.1} parent=63 // pred_fallthru
          _
      $region64: #{tpu_custom_call.1} parent=5 // pred_fallthru
        _
    $region6: #{tpu_custom_call.1} parent=1 // loop_footer
      %s26 = sadd.s32 1, %s22
    $region7: #{tpu_custom_call.1} parent=1 // loop_footer_branch
      %21 = sbr.rel target = $region3
    $region8: #{tpu_custom_call.1} parent=1 // loop_exit
      _
    %840 = vsyncpa [#allocation4], 1
    %s841 = scalar_lea.sflag [#allocation4], 1
    %842 = vsyncpa %s841, 1
    %843 = vsyncpa [#allocation7], 1
    %s844 = scalar_lea.sflag [#allocation7], 1
    %845 = vsyncpa %s844, 1
    %846 = vsyncpa [#allocation10], 1
    %847 = vsyncpa [#allocation5], 1
    %s848 = scalar_lea.sflag [#allocation5], 1
    %849 = vsyncpa %s848, 1

</llo_original>
